<compile_context>
chip_gen: v5e
topology: v5e:2x2
jax: 0.10.0
libtpu: 0.0.40
codegen_flags: <defaults>
</compile_context>

<pallas_src>
import functools
import math

import jax
import jax.numpy as jnp
from jax.experimental import pallas as pl
from jax.experimental.pallas import tpu as pltpu


_MAX_TM = 8192              # cap on rows-per-block of the kernel's 2-D view
_TARGET_FOLD_LANES = 512    # aim for >= 512 stored lanes when folding narrow H
_MAX_FOLD_LANES = 4096      # don't fold beyond this stored row width


def _sublane(dtype) -> int:
    """Packed sublane multiple for a dtype (8 f32 / 16 bf16 / 32 int8|fp8)."""
    return {4: 8, 2: 16, 1: 32}.get(jnp.dtype(dtype).itemsize, 8)


def _vmem_budget_bytes():
    """(per-block VMEM budget, scoped-VMEM limit) picked per TPU generation."""
    cap = None
    try:
        cap = getattr(pltpu.get_tpu_info(), "vmem_capacity_bytes", None)
    except Exception:
        cap = None
    if cap is not None and cap >= 100 * 1024 * 1024:
        # v5e / v6e: 128 MiB physical VMEM. Big blocks amortize the ~0.35 us
        # per-step pipeline overhead; these chips are firmly HBM-bound.
        return 56 * 1024 * 1024, 96 * 1024 * 1024
    # v7x (64 MiB physical) or unknown chip: stay conservative, leave headroom
    # for compiler temps (the f32 upcast roughly doubles live VMEM for bf16).
    return 20 * 1024 * 1024, 40 * 1024 * 1024


def _choose_fold(rows, hidden):
    """Fold k logical rows into one stored row of k*hidden lanes.

    Only when hidden is narrow (not a multiple of 128) and rows % k == 0, so
    no padding is ever introduced. Makes loads/stores lane-dense.
    """
    if hidden >= 512 or hidden % 128 == 0 or rows <= 1:
        return 1
    base = 128 // math.gcd(hidden, 128)   # smallest k with k*hidden % 128 == 0
    best = 1
    k = base
    while k <= rows and k * hidden <= _MAX_FOLD_LANES:
        if rows % k == 0:
            best = k
            if k * hidden >= _TARGET_FOLD_LANES:
                break
        k += base
    return best


def _choose_row_tile(rows, lanes, in_bytes, out_bytes, sublane, budget):
    """Rows-per-block sized by VMEM bytes, with a >=2-grid-step guarantee."""
    # Per-row VMEM: double-buffered input + output, plus ~3 f32 temporaries
    # (upcast / centered / normalized) — over-estimating beats spilling.
    per_row = lanes * (2 * in_bytes + 2 * out_bytes + 12)
    tm = int(min(budget // max(per_row, 1), _MAX_TM))
    if tm >= rows:
        # One block would cover all rows; keep at least 2 grid steps so both
        # TensorCores get work on megacore chips (v7x). Cheap elsewhere.
        if rows >= 2 * sublane:
            tm = pl.cdiv(pl.cdiv(rows, 2), sublane) * sublane
        else:
            tm = rows                      # full extent (allowed even < sublane)
    else:
        # TODO(synk): for extremely wide hidden dims (tm pinned to one sublane
        # group and still over budget), add a second 'arbitrary' grid axis over
        # the lane dim with partial-stat accumulation in VMEM scratch.
        tm = max(sublane, (tm // sublane) * sublane)
    return max(1, min(tm, rows))


def _layernorm_kernel(x_ref, w_ref, b_ref, o_ref, *, eps, hidden, fold):
    # x_ref / o_ref : (tm, fold*hidden) stored tile; every `hidden`-lane
    # segment is one logical row. w_ref / b_ref : (1, hidden).
    pdtype = x_ref.dtype
    w = w_ref[...]
    b = b_ref[...]
    for g in range(fold):                       # static unroll over segments
        lo, hi = g * hidden, (g + 1) * hidden
        xg = x_ref[:, lo:hi].astype(jnp.float32)

        # Two-pass statistics (matches PyTorch exactly; no E[x^2]-E[x]^2
        # cancellation for large means).
        u = jnp.mean(xg, axis=-1, keepdims=True)
        xc = xg - u
        s = jnp.mean(xc * xc, axis=-1, keepdims=True)

        # rsqrt on the (tm, 1) stats (EUP slot) + broadcast multiply on the
        # VPU instead of dividing the whole tile by sqrt.
        xn = xc * jax.lax.rsqrt(s + eps)

        # Match PyTorch: cast back to the input dtype BEFORE the affine.
        o_ref[:, lo:hi] = (w * xn.astype(pdtype) + b).astype(o_ref.dtype)


def layer_norm(x, weight, bias, eps=1e-5, block_rows=None):
    """TF-style LayerNorm over the last dim of x (matches the PyTorch module)."""
    orig_shape = x.shape
    H = orig_shape[-1]
    x2 = x.reshape(-1, H)
    R = x2.shape[0]

    # PyTorch return dtype follows promotion of x (post-cast-back) with w/b.
    out_dtype = jnp.result_type(x.dtype, weight.dtype, bias.dtype)

    # Lane-dense repack for narrow hidden dims (no padding ever introduced).
    fold = _choose_fold(R, H)
    Rf, L = R // fold, fold * H
    xk = x2.reshape(Rf, L) if fold > 1 else x2     # contiguous reshape: free

    sub = max(_sublane(x.dtype), _sublane(out_dtype))
    budget, vmem_limit = _vmem_budget_bytes()

    if block_rows is not None:
        tm = int(block_rows)
        tm = Rf if tm >= Rf else max(sub, (tm // sub) * sub)
    else:
        tm = _choose_row_tile(Rf, L,
                              jnp.dtype(x.dtype).itemsize,
                              jnp.dtype(out_dtype).itemsize,
                              sub, budget)

    grid = (pl.cdiv(Rf, tm),)                      # ragged final block is fine

    w2 = weight.reshape(1, H)
    b2 = bias.reshape(1, H)

    kernel = functools.partial(_layernorm_kernel, eps=float(eps),
                               hidden=H, fold=fold)

    out = pl.pallas_call(
        kernel,
        out_shape=jax.ShapeDtypeStruct((Rf, L), out_dtype),
        grid_spec=pltpu.PrefetchScalarGridSpec(
            num_scalar_prefetch=0,
            grid=grid,
            in_specs=[
                pl.BlockSpec((tm, L), lambda i: (i, 0)),
                pl.BlockSpec((1, H), lambda i: (0, 0)),
                pl.BlockSpec((1, H), lambda i: (0, 0)),
            ],
            out_specs=pl.BlockSpec((tm, L), lambda i: (i, 0)),
        ),
        compiler_params=pltpu.CompilerParams(
            dimension_semantics=("parallel",),
            vmem_limit_bytes=vmem_limit,
        ),
    )(xk, w2, b2)

    return out.reshape(orig_shape)


def layer_norm_ref(x, weight, bias, eps=1e-5):
    pdtype = x.dtype
    xf = x.astype(jnp.float32)
    u = jnp.mean(xf, axis=-1, keepdims=True)
    s = jnp.mean((xf - u) ** 2, axis=-1, keepdims=True)
    xn = (xf - u) / jnp.sqrt(s + eps)
    return weight * xn.astype(pdtype) + bias


if __name__ == "__main__":
    key = jax.random.PRNGKey(0)
    k_x, k_w, k_b = jax.random.split(key, 3)

    batch, seq, hidden = 2, 8, 32
    x = jax.random.normal(k_x, (batch, seq, hidden), dtype=jnp.float32)

    # Module inits weight=ones, bias=zeros; use deterministic random values so
    # both affine terms are exercised.
    weight = 1.0 + 0.1 * jax.random.normal(k_w, (hidden,), dtype=jnp.float32)
    bias = 0.05 * jax.random.normal(k_b, (hidden,), dtype=jnp.float32)

    out = jax.block_until_ready(layer_norm(x, weight, bias, eps=1e-5))
    ref = layer_norm_ref(x, weight, bias, eps=1e-5)
    assert out.shape == ref.shape and out.dtype == ref.dtype
    assert jnp.allclose(out, ref, atol=1e-5, rtol=1e-5), "mismatch vs reference"

    # Ragged row count (not a multiple of the row tile) + explicit block_rows:
    # exercises the partial-final-block path (no wrapper-side pad/slice).
    x_odd = jax.random.normal(key, (3, 5, hidden), dtype=jnp.float32)
    out_odd = jax.block_until_ready(layer_norm(x_odd, weight, bias, block_rows=8))
    ref_odd = layer_norm_ref(x_odd, weight, bias)
    assert jnp.allclose(out_odd, ref_odd, atol=1e-5, rtol=1e-5), "mismatch (ragged)"

    print("KERNEL_OK")
</pallas_src>

<mosaic_0001>
module attributes {stable_mosaic.version = 11 : i64} {
  func.func @_layernorm_kernel(%arg0: i32, %arg1: memref<1x512xf32, #tpu.memory_space<vmem>>, %arg2: memref<1x32xf32, #tpu.memory_space<vmem>>, %arg3: memref<1x32xf32, #tpu.memory_space<vmem>>, %arg4: memref<1x512xf32, #tpu.memory_space<vmem>>) attributes {dimension_semantics = [#tpu.dimension_semantics<parallel>], iteration_bounds = array<i64: 1>, scalar_prefetch = 0 : i64, scratch_operands = 0 : i64, tpu.core_type = #tpu.core_type<tc>, window_params = [{transform_indices = @transform_0, window_bounds = array<i64: 1, 512>}, {pipeline_mode = #tpu.pipeline_mode<synchronous>, transform_indices = @transform_1, window_bounds = array<i64: 1, 32>}, {pipeline_mode = #tpu.pipeline_mode<synchronous>, transform_indices = @transform_2, window_bounds = array<i64: 1, 32>}, {transform_indices = @transform_3, window_bounds = array<i64: 1, 512>}]} {
    %c0 = arith.constant 0 : index
    %c0_0 = arith.constant 0 : index
    %0 = vector.load %arg2[%c0, %c0_0] : memref<1x32xf32, #tpu.memory_space<vmem>>, vector<1x32xf32>
    %c0_1 = arith.constant 0 : index
    %c0_2 = arith.constant 0 : index
    %1 = vector.load %arg3[%c0_1, %c0_2] : memref<1x32xf32, #tpu.memory_space<vmem>>, vector<1x32xf32>
    %c0_3 = arith.constant 0 : index
    %c0_4 = arith.constant 0 : index
    %2 = vector.load %arg1[%c0_3, %c0_4] : memref<1x512xf32, #tpu.memory_space<vmem>>, vector<1x32xf32>
    %cst = arith.constant dense<0.000000e+00> : vector<1xf32>
    %3 = vector.multi_reduction <add>, %2, %cst [1] : vector<1x32xf32> to vector<1xf32>
    %4 = vector.shape_cast %3 : vector<1xf32> to vector<1x1xf32>
    %cst_5 = arith.constant 3.200000e+01 : f32
    %5 = vector.broadcast %cst_5 : f32 to vector<1x1xf32>
    %6 = arith.divf %4, %5 : vector<1x1xf32>
    %7 = vector.broadcast %6 : vector<1x1xf32> to vector<1x32xf32>
    %8 = arith.subf %2, %7 : vector<1x32xf32>
    %9 = arith.mulf %8, %8 : vector<1x32xf32>
    %cst_6 = arith.constant dense<0.000000e+00> : vector<1xf32>
    %10 = vector.multi_reduction <add>, %9, %cst_6 [1] : vector<1x32xf32> to vector<1xf32>
    %11 = vector.shape_cast %10 : vector<1xf32> to vector<1x1xf32>
    %cst_7 = arith.constant 3.200000e+01 : f32
    %12 = vector.broadcast %cst_7 : f32 to vector<1x1xf32>
    %13 = arith.divf %11, %12 : vector<1x1xf32>
    %cst_8 = arith.constant 9.99999974E-6 : f32
    %14 = vector.broadcast %cst_8 : f32 to vector<1x1xf32>
    %15 = arith.addf %13, %14 : vector<1x1xf32>
    %16 = math.rsqrt %15 : vector<1x1xf32>
    %17 = vector.broadcast %16 : vector<1x1xf32> to vector<1x32xf32>
    %18 = arith.mulf %8, %17 : vector<1x32xf32>
    %19 = arith.mulf %0, %18 : vector<1x32xf32>
    %20 = arith.addf %19, %1 : vector<1x32xf32>
    %c0_9 = arith.constant 0 : index
    %c0_10 = arith.constant 0 : index
    %21 = vector.load %arg4[%c0_9, %c0_10] : memref<1x512xf32, #tpu.memory_space<vmem>>, vector<1x32xf32>
    tpu.vector_store %arg4[%c0_9, %c0_10], %20 {strides = array<i32>} : memref<1x512xf32, #tpu.memory_space<vmem>>, vector<1x32xf32>,
    %c0_11 = arith.constant 0 : index
    %c32 = arith.constant 32 : index
    %22 = vector.load %arg1[%c0_11, %c32] : memref<1x512xf32, #tpu.memory_space<vmem>>, vector<1x32xf32>
    %cst_12 = arith.constant dense<0.000000e+00> : vector<1xf32>
    %23 = vector.multi_reduction <add>, %22, %cst_12 [1] : vector<1x32xf32> to vector<1xf32>
    %24 = vector.shape_cast %23 : vector<1xf32> to vector<1x1xf32>
    %cst_13 = arith.constant 3.200000e+01 : f32
    %25 = vector.broadcast %cst_13 : f32 to vector<1x1xf32>
    %26 = arith.divf %24, %25 : vector<1x1xf32>
    %27 = vector.broadcast %26 : vector<1x1xf32> to vector<1x32xf32>
    %28 = arith.subf %22, %27 : vector<1x32xf32>
    %29 = arith.mulf %28, %28 : vector<1x32xf32>
    %cst_14 = arith.constant dense<0.000000e+00> : vector<1xf32>
    %30 = vector.multi_reduction <add>, %29, %cst_14 [1] : vector<1x32xf32> to vector<1xf32>
    %31 = vector.shape_cast %30 : vector<1xf32> to vector<1x1xf32>
    %cst_15 = arith.constant 3.200000e+01 : f32
    %32 = vector.broadcast %cst_15 : f32 to vector<1x1xf32>
    %33 = arith.divf %31, %32 : vector<1x1xf32>
    %cst_16 = arith.constant 9.99999974E-6 : f32
    %34 = vector.broadcast %cst_16 : f32 to vector<1x1xf32>
    %35 = arith.addf %33, %34 : vector<1x1xf32>
    %36 = math.rsqrt %35 : vector<1x1xf32>
    %37 = vector.broadcast %36 : vector<1x1xf32> to vector<1x32xf32>
    %38 = arith.mulf %28, %37 : vector<1x32xf32>
    %39 = arith.mulf %0, %38 : vector<1x32xf32>
    %40 = arith.addf %39, %1 : vector<1x32xf32>
    %c0_17 = arith.constant 0 : index
    %c32_18 = arith.constant 32 : index
    %41 = vector.load %arg4[%c0_17, %c32_18] : memref<1x512xf32, #tpu.memory_space<vmem>>, vector<1x32xf32>
    tpu.vector_store %arg4[%c0_17, %c32_18], %40 {strides = array<i32>} : memref<1x512xf32, #tpu.memory_space<vmem>>, vector<1x32xf32>,
    %c0_19 = arith.constant 0 : index
    %c64 = arith.constant 64 : index
    %42 = vector.load %arg1[%c0_19, %c64] : memref<1x512xf32, #tpu.memory_space<vmem>>, vector<1x32xf32>
    %cst_20 = arith.constant dense<0.000000e+00> : vector<1xf32>
    %43 = vector.multi_reduction <add>, %42, %cst_20 [1] : vector<1x32xf32> to vector<1xf32>
    %44 = vector.shape_cast %43 : vector<1xf32> to vector<1x1xf32>
    %cst_21 = arith.constant 3.200000e+01 : f32
    %45 = vector.broadcast %cst_21 : f32 to vector<1x1xf32>
    %46 = arith.divf %44, %45 : vector<1x1xf32>
    %47 = vector.broadcast %46 : vector<1x1xf32> to vector<1x32xf32>
    %48 = arith.subf %42, %47 : vector<1x32xf32>
    %49 = arith.mulf %48, %48 : vector<1x32xf32>
    %cst_22 = arith.constant dense<0.000000e+00> : vector<1xf32>
    %50 = vector.multi_reduction <add>, %49, %cst_22 [1] : vector<1x32xf32> to vector<1xf32>
    %51 = vector.shape_cast %50 : vector<1xf32> to vector<1x1xf32>
    %cst_23 = arith.constant 3.200000e+01 : f32
    %52 = vector.broadcast %cst_23 : f32 to vector<1x1xf32>
    %53 = arith.divf %51, %52 : vector<1x1xf32>
    %cst_24 = arith.constant 9.99999974E-6 : f32
    %54 = vector.broadcast %cst_24 : f32 to vector<1x1xf32>
    %55 = arith.addf %53, %54 : vector<1x1xf32>
    %56 = math.rsqrt %55 : vector<1x1xf32>
    %57 = vector.broadcast %56 : vector<1x1xf32> to vector<1x32xf32>
    %58 = arith.mulf %48, %57 : vector<1x32xf32>
    %59 = arith.mulf %0, %58 : vector<1x32xf32>
    %60 = arith.addf %59, %1 : vector<1x32xf32>
    %c0_25 = arith.constant 0 : index
    %c64_26 = arith.constant 64 : index
    %61 = vector.load %arg4[%c0_25, %c64_26] : memref<1x512xf32, #tpu.memory_space<vmem>>, vector<1x32xf32>
    tpu.vector_store %arg4[%c0_25, %c64_26], %60 {strides = array<i32>} : memref<1x512xf32, #tpu.memory_space<vmem>>, vector<1x32xf32>,
    %c0_27 = arith.constant 0 : index
    %c96 = arith.constant 96 : index
    %62 = vector.load %arg1[%c0_27, %c96] : memref<1x512xf32, #tpu.memory_space<vmem>>, vector<1x32xf32>
    %cst_28 = arith.constant dense<0.000000e+00> : vector<1xf32>
    %63 = vector.multi_reduction <add>, %62, %cst_28 [1] : vector<1x32xf32> to vector<1xf32>
    %64 = vector.shape_cast %63 : vector<1xf32> to vector<1x1xf32>
    %cst_29 = arith.constant 3.200000e+01 : f32
    %65 = vector.broadcast %cst_29 : f32 to vector<1x1xf32>
    %66 = arith.divf %64, %65 : vector<1x1xf32>
    %67 = vector.broadcast %66 : vector<1x1xf32> to vector<1x32xf32>
    %68 = arith.subf %62, %67 : vector<1x32xf32>
    %69 = arith.mulf %68, %68 : vector<1x32xf32>
    %cst_30 = arith.constant dense<0.000000e+00> : vector<1xf32>
    %70 = vector.multi_reduction <add>, %69, %cst_30 [1] : vector<1x32xf32> to vector<1xf32>
    %71 = vector.shape_cast %70 : vector<1xf32> to vector<1x1xf32>
    %cst_31 = arith.constant 3.200000e+01 : f32
    %72 = vector.broadcast %cst_31 : f32 to vector<1x1xf32>
    %73 = arith.divf %71, %72 : vector<1x1xf32>
    %cst_32 = arith.constant 9.99999974E-6 : f32
    %74 = vector.broadcast %cst_32 : f32 to vector<1x1xf32>
    %75 = arith.addf %73, %74 : vector<1x1xf32>
    %76 = math.rsqrt %75 : vector<1x1xf32>
    %77 = vector.broadcast %76 : vector<1x1xf32> to vector<1x32xf32>
    %78 = arith.mulf %68, %77 : vector<1x32xf32>
    %79 = arith.mulf %0, %78 : vector<1x32xf32>
    %80 = arith.addf %79, %1 : vector<1x32xf32>
    %c0_33 = arith.constant 0 : index
    %c96_34 = arith.constant 96 : index
    %81 = vector.load %arg4[%c0_33, %c96_34] : memref<1x512xf32, #tpu.memory_space<vmem>>, vector<1x32xf32>
    tpu.vector_store %arg4[%c0_33, %c96_34], %80 {strides = array<i32>} : memref<1x512xf32, #tpu.memory_space<vmem>>, vector<1x32xf32>,
    %c0_35 = arith.constant 0 : index
    %c128 = arith.constant 128 : index
    %82 = vector.load %arg1[%c0_35, %c128] : memref<1x512xf32, #tpu.memory_space<vmem>>, vector<1x32xf32>
    %cst_36 = arith.constant dense<0.000000e+00> : vector<1xf32>
    %83 = vector.multi_reduction <add>, %82, %cst_36 [1] : vector<1x32xf32> to vector<1xf32>
    %84 = vector.shape_cast %83 : vector<1xf32> to vector<1x1xf32>
    %cst_37 = arith.constant 3.200000e+01 : f32
    %85 = vector.broadcast %cst_37 : f32 to vector<1x1xf32>
    %86 = arith.divf %84, %85 : vector<1x1xf32>
    %87 = vector.broadcast %86 : vector<1x1xf32> to vector<1x32xf32>
    %88 = arith.subf %82, %87 : vector<1x32xf32>
    %89 = arith.mulf %88, %88 : vector<1x32xf32>
    %cst_38 = arith.constant dense<0.000000e+00> : vector<1xf32>
    %90 = vector.multi_reduction <add>, %89, %cst_38 [1] : vector<1x32xf32> to vector<1xf32>
    %91 = vector.shape_cast %90 : vector<1xf32> to vector<1x1xf32>
    %cst_39 = arith.constant 3.200000e+01 : f32
    %92 = vector.broadcast %cst_39 : f32 to vector<1x1xf32>
    %93 = arith.divf %91, %92 : vector<1x1xf32>
    %cst_40 = arith.constant 9.99999974E-6 : f32
    %94 = vector.broadcast %cst_40 : f32 to vector<1x1xf32>
    %95 = arith.addf %93, %94 : vector<1x1xf32>
    %96 = math.rsqrt %95 : vector<1x1xf32>
    %97 = vector.broadcast %96 : vector<1x1xf32> to vector<1x32xf32>
    %98 = arith.mulf %88, %97 : vector<1x32xf32>
    %99 = arith.mulf %0, %98 : vector<1x32xf32>
    %100 = arith.addf %99, %1 : vector<1x32xf32>
    %c0_41 = arith.constant 0 : index
    %c128_42 = arith.constant 128 : index
    %101 = vector.load %arg4[%c0_41, %c128_42] : memref<1x512xf32, #tpu.memory_space<vmem>>, vector<1x32xf32>
    tpu.vector_store %arg4[%c0_41, %c128_42], %100 {strides = array<i32>} : memref<1x512xf32, #tpu.memory_space<vmem>>, vector<1x32xf32>,
    %c0_43 = arith.constant 0 : index
    %c160 = arith.constant 160 : index
    %102 = vector.load %arg1[%c0_43, %c160] : memref<1x512xf32, #tpu.memory_space<vmem>>, vector<1x32xf32>
    %cst_44 = arith.constant dense<0.000000e+00> : vector<1xf32>
    %103 = vector.multi_reduction <add>, %102, %cst_44 [1] : vector<1x32xf32> to vector<1xf32>
    %104 = vector.shape_cast %103 : vector<1xf32> to vector<1x1xf32>
    %cst_45 = arith.constant 3.200000e+01 : f32
    %105 = vector.broadcast %cst_45 : f32 to vector<1x1xf32>
    %106 = arith.divf %104, %105 : vector<1x1xf32>
    %107 = vector.broadcast %106 : vector<1x1xf32> to vector<1x32xf32>
    %108 = arith.subf %102, %107 : vector<1x32xf32>
    %109 = arith.mulf %108, %108 : vector<1x32xf32>
    %cst_46 = arith.constant dense<0.000000e+00> : vector<1xf32>
    %110 = vector.multi_reduction <add>, %109, %cst_46 [1] : vector<1x32xf32> to vector<1xf32>
    %111 = vector.shape_cast %110 : vector<1xf32> to vector<1x1xf32>
    %cst_47 = arith.constant 3.200000e+01 : f32
    %112 = vector.broadcast %cst_47 : f32 to vector<1x1xf32>
    %113 = arith.divf %111, %112 : vector<1x1xf32>
    %cst_48 = arith.constant 9.99999974E-6 : f32
    %114 = vector.broadcast %cst_48 : f32 to vector<1x1xf32>
    %115 = arith.addf %113, %114 : vector<1x1xf32>
    %116 = math.rsqrt %115 : vector<1x1xf32>
    %117 = vector.broadcast %116 : vector<1x1xf32> to vector<1x32xf32>
    %118 = arith.mulf %108, %117 : vector<1x32xf32>
    %119 = arith.mulf %0, %118 : vector<1x32xf32>
    %120 = arith.addf %119, %1 : vector<1x32xf32>
    %c0_49 = arith.constant 0 : index
    %c160_50 = arith.constant 160 : index
    %121 = vector.load %arg4[%c0_49, %c160_50] : memref<1x512xf32, #tpu.memory_space<vmem>>, vector<1x32xf32>
    tpu.vector_store %arg4[%c0_49, %c160_50], %120 {strides = array<i32>} : memref<1x512xf32, #tpu.memory_space<vmem>>, vector<1x32xf32>,
    %c0_51 = arith.constant 0 : index
    %c192 = arith.constant 192 : index
    %122 = vector.load %arg1[%c0_51, %c192] : memref<1x512xf32, #tpu.memory_space<vmem>>, vector<1x32xf32>
    %cst_52 = arith.constant dense<0.000000e+00> : vector<1xf32>
    %123 = vector.multi_reduction <add>, %122, %cst_52 [1] : vector<1x32xf32> to vector<1xf32>
    %124 = vector.shape_cast %123 : vector<1xf32> to vector<1x1xf32>
    %cst_53 = arith.constant 3.200000e+01 : f32
    %125 = vector.broadcast %cst_53 : f32 to vector<1x1xf32>
    %126 = arith.divf %124, %125 : vector<1x1xf32>
    %127 = vector.broadcast %126 : vector<1x1xf32> to vector<1x32xf32>
    %128 = arith.subf %122, %127 : vector<1x32xf32>
    %129 = arith.mulf %128, %128 : vector<1x32xf32>
    %cst_54 = arith.constant dense<0.000000e+00> : vector<1xf32>
    %130 = vector.multi_reduction <add>, %129, %cst_54 [1] : vector<1x32xf32> to vector<1xf32>
    %131 = vector.shape_cast %130 : vector<1xf32> to vector<1x1xf32>
    %cst_55 = arith.constant 3.200000e+01 : f32
    %132 = vector.broadcast %cst_55 : f32 to vector<1x1xf32>
    %133 = arith.divf %131, %132 : vector<1x1xf32>
    %cst_56 = arith.constant 9.99999974E-6 : f32
    %134 = vector.broadcast %cst_56 : f32 to vector<1x1xf32>
    %135 = arith.addf %133, %134 : vector<1x1xf32>
    %136 = math.rsqrt %135 : vector<1x1xf32>
    %137 = vector.broadcast %136 : vector<1x1xf32> to vector<1x32xf32>
    %138 = arith.mulf %128, %137 : vector<1x32xf32>
    %139 = arith.mulf %0, %138 : vector<1x32xf32>
    %140 = arith.addf %139, %1 : vector<1x32xf32>
    %c0_57 = arith.constant 0 : index
    %c192_58 = arith.constant 192 : index
    %141 = vector.load %arg4[%c0_57, %c192_58] : memref<1x512xf32, #tpu.memory_space<vmem>>, vector<1x32xf32>
    tpu.vector_store %arg4[%c0_57, %c192_58], %140 {strides = array<i32>} : memref<1x512xf32, #tpu.memory_space<vmem>>, vector<1x32xf32>,
    %c0_59 = arith.constant 0 : index
    %c224 = arith.constant 224 : index
    %142 = vector.load %arg1[%c0_59, %c224] : memref<1x512xf32, #tpu.memory_space<vmem>>, vector<1x32xf32>
    %cst_60 = arith.constant dense<0.000000e+00> : vector<1xf32>
    %143 = vector.multi_reduction <add>, %142, %cst_60 [1] : vector<1x32xf32> to vector<1xf32>
    %144 = vector.shape_cast %143 : vector<1xf32> to vector<1x1xf32>
    %cst_61 = arith.constant 3.200000e+01 : f32
    %145 = vector.broadcast %cst_61 : f32 to vector<1x1xf32>
    %146 = arith.divf %144, %145 : vector<1x1xf32>
    %147 = vector.broadcast %146 : vector<1x1xf32> to vector<1x32xf32>
    %148 = arith.subf %142, %147 : vector<1x32xf32>
    %149 = arith.mulf %148, %148 : vector<1x32xf32>
    %cst_62 = arith.constant dense<0.000000e+00> : vector<1xf32>
    %150 = vector.multi_reduction <add>, %149, %cst_62 [1] : vector<1x32xf32> to vector<1xf32>
    %151 = vector.shape_cast %150 : vector<1xf32> to vector<1x1xf32>
    %cst_63 = arith.constant 3.200000e+01 : f32
    %152 = vector.broadcast %cst_63 : f32 to vector<1x1xf32>
    %153 = arith.divf %151, %152 : vector<1x1xf32>
    %cst_64 = arith.constant 9.99999974E-6 : f32
    %154 = vector.broadcast %cst_64 : f32 to vector<1x1xf32>
    %155 = arith.addf %153, %154 : vector<1x1xf32>
    %156 = math.rsqrt %155 : vector<1x1xf32>
    %157 = vector.broadcast %156 : vector<1x1xf32> to vector<1x32xf32>
    %158 = arith.mulf %148, %157 : vector<1x32xf32>
    %159 = arith.mulf %0, %158 : vector<1x32xf32>
    %160 = arith.addf %159, %1 : vector<1x32xf32>
    %c0_65 = arith.constant 0 : index
    %c224_66 = arith.constant 224 : index
    %161 = vector.load %arg4[%c0_65, %c224_66] : memref<1x512xf32, #tpu.memory_space<vmem>>, vector<1x32xf32>
    tpu.vector_store %arg4[%c0_65, %c224_66], %160 {strides = array<i32>} : memref<1x512xf32, #tpu.memory_space<vmem>>, vector<1x32xf32>,
    %c0_67 = arith.constant 0 : index
    %c256 = arith.constant 256 : index
    %162 = vector.load %arg1[%c0_67, %c256] : memref<1x512xf32, #tpu.memory_space<vmem>>, vector<1x32xf32>
    %cst_68 = arith.constant dense<0.000000e+00> : vector<1xf32>
    %163 = vector.multi_reduction <add>, %162, %cst_68 [1] : vector<1x32xf32> to vector<1xf32>
    %164 = vector.shape_cast %163 : vector<1xf32> to vector<1x1xf32>
    %cst_69 = arith.constant 3.200000e+01 : f32
    %165 = vector.broadcast %cst_69 : f32 to vector<1x1xf32>
    %166 = arith.divf %164, %165 : vector<1x1xf32>
    %167 = vector.broadcast %166 : vector<1x1xf32> to vector<1x32xf32>
    %168 = arith.subf %162, %167 : vector<1x32xf32>
    %169 = arith.mulf %168, %168 : vector<1x32xf32>
    %cst_70 = arith.constant dense<0.000000e+00> : vector<1xf32>
    %170 = vector.multi_reduction <add>, %169, %cst_70 [1] : vector<1x32xf32> to vector<1xf32>
    %171 = vector.shape_cast %170 : vector<1xf32> to vector<1x1xf32>
    %cst_71 = arith.constant 3.200000e+01 : f32
    %172 = vector.broadcast %cst_71 : f32 to vector<1x1xf32>
    %173 = arith.divf %171, %172 : vector<1x1xf32>
    %cst_72 = arith.constant 9.99999974E-6 : f32
    %174 = vector.broadcast %cst_72 : f32 to vector<1x1xf32>
    %175 = arith.addf %173, %174 : vector<1x1xf32>
    %176 = math.rsqrt %175 : vector<1x1xf32>
    %177 = vector.broadcast %176 : vector<1x1xf32> to vector<1x32xf32>
    %178 = arith.mulf %168, %177 : vector<1x32xf32>
    %179 = arith.mulf %0, %178 : vector<1x32xf32>
    %180 = arith.addf %179, %1 : vector<1x32xf32>
    %c0_73 = arith.constant 0 : index
    %c256_74 = arith.constant 256 : index
    %181 = vector.load %arg4[%c0_73, %c256_74] : memref<1x512xf32, #tpu.memory_space<vmem>>, vector<1x32xf32>
    tpu.vector_store %arg4[%c0_73, %c256_74], %180 {strides = array<i32>} : memref<1x512xf32, #tpu.memory_space<vmem>>, vector<1x32xf32>,
    %c0_75 = arith.constant 0 : index
    %c288 = arith.constant 288 : index
    %182 = vector.load %arg1[%c0_75, %c288] : memref<1x512xf32, #tpu.memory_space<vmem>>, vector<1x32xf32>
    %cst_76 = arith.constant dense<0.000000e+00> : vector<1xf32>
    %183 = vector.multi_reduction <add>, %182, %cst_76 [1] : vector<1x32xf32> to vector<1xf32>
    %184 = vector.shape_cast %183 : vector<1xf32> to vector<1x1xf32>
    %cst_77 = arith.constant 3.200000e+01 : f32
    %185 = vector.broadcast %cst_77 : f32 to vector<1x1xf32>
    %186 = arith.divf %184, %185 : vector<1x1xf32>
    %187 = vector.broadcast %186 : vector<1x1xf32> to vector<1x32xf32>
    %188 = arith.subf %182, %187 : vector<1x32xf32>
    %189 = arith.mulf %188, %188 : vector<1x32xf32>
    %cst_78 = arith.constant dense<0.000000e+00> : vector<1xf32>
    %190 = vector.multi_reduction <add>, %189, %cst_78 [1] : vector<1x32xf32> to vector<1xf32>
    %191 = vector.shape_cast %190 : vector<1xf32> to vector<1x1xf32>
    %cst_79 = arith.constant 3.200000e+01 : f32
    %192 = vector.broadcast %cst_79 : f32 to vector<1x1xf32>
    %193 = arith.divf %191, %192 : vector<1x1xf32>
    %cst_80 = arith.constant 9.99999974E-6 : f32
    %194 = vector.broadcast %cst_80 : f32 to vector<1x1xf32>
    %195 = arith.addf %193, %194 : vector<1x1xf32>
    %196 = math.rsqrt %195 : vector<1x1xf32>
    %197 = vector.broadcast %196 : vector<1x1xf32> to vector<1x32xf32>
    %198 = arith.mulf %188, %197 : vector<1x32xf32>
    %199 = arith.mulf %0, %198 : vector<1x32xf32>
    %200 = arith.addf %199, %1 : vector<1x32xf32>
    %c0_81 = arith.constant 0 : index
    %c288_82 = arith.constant 288 : index
    %201 = vector.load %arg4[%c0_81, %c288_82] : memref<1x512xf32, #tpu.memory_space<vmem>>, vector<1x32xf32>
    tpu.vector_store %arg4[%c0_81, %c288_82], %200 {strides = array<i32>} : memref<1x512xf32, #tpu.memory_space<vmem>>, vector<1x32xf32>,
    %c0_83 = arith.constant 0 : index
    %c320 = arith.constant 320 : index
    %202 = vector.load %arg1[%c0_83, %c320] : memref<1x512xf32, #tpu.memory_space<vmem>>, vector<1x32xf32>
    %cst_84 = arith.constant dense<0.000000e+00> : vector<1xf32>
    %203 = vector.multi_reduction <add>, %202, %cst_84 [1] : vector<1x32xf32> to vector<1xf32>
    %204 = vector.shape_cast %203 : vector<1xf32> to vector<1x1xf32>
    %cst_85 = arith.constant 3.200000e+01 : f32
    %205 = vector.broadcast %cst_85 : f32 to vector<1x1xf32>
    %206 = arith.divf %204, %205 : vector<1x1xf32>
    %207 = vector.broadcast %206 : vector<1x1xf32> to vector<1x32xf32>
    %208 = arith.subf %202, %207 : vector<1x32xf32>
    %209 = arith.mulf %208, %208 : vector<1x32xf32>
    %cst_86 = arith.constant dense<0.000000e+00> : vector<1xf32>
    %210 = vector.multi_reduction <add>, %209, %cst_86 [1] : vector<1x32xf32> to vector<1xf32>
    %211 = vector.shape_cast %210 : vector<1xf32> to vector<1x1xf32>
    %cst_87 = arith.constant 3.200000e+01 : f32
    %212 = vector.broadcast %cst_87 : f32 to vector<1x1xf32>
    %213 = arith.divf %211, %212 : vector<1x1xf32>
    %cst_88 = arith.constant 9.99999974E-6 : f32
    %214 = vector.broadcast %cst_88 : f32 to vector<1x1xf32>
    %215 = arith.addf %213, %214 : vector<1x1xf32>
    %216 = math.rsqrt %215 : vector<1x1xf32>
    %217 = vector.broadcast %216 : vector<1x1xf32> to vector<1x32xf32>
    %218 = arith.mulf %208, %217 : vector<1x32xf32>
    %219 = arith.mulf %0, %218 : vector<1x32xf32>
    %220 = arith.addf %219, %1 : vector<1x32xf32>
    %c0_89 = arith.constant 0 : index
    %c320_90 = arith.constant 320 : index
    %221 = vector.load %arg4[%c0_89, %c320_90] : memref<1x512xf32, #tpu.memory_space<vmem>>, vector<1x32xf32>
    tpu.vector_store %arg4[%c0_89, %c320_90], %220 {strides = array<i32>} : memref<1x512xf32, #tpu.memory_space<vmem>>, vector<1x32xf32>,
    %c0_91 = arith.constant 0 : index
    %c352 = arith.constant 352 : index
    %222 = vector.load %arg1[%c0_91, %c352] : memref<1x512xf32, #tpu.memory_space<vmem>>, vector<1x32xf32>
    %cst_92 = arith.constant dense<0.000000e+00> : vector<1xf32>
    %223 = vector.multi_reduction <add>, %222, %cst_92 [1] : vector<1x32xf32> to vector<1xf32>
    %224 = vector.shape_cast %223 : vector<1xf32> to vector<1x1xf32>
    %cst_93 = arith.constant 3.200000e+01 : f32
    %225 = vector.broadcast %cst_93 : f32 to vector<1x1xf32>
    %226 = arith.divf %224, %225 : vector<1x1xf32>
    %227 = vector.broadcast %226 : vector<1x1xf32> to vector<1x32xf32>
    %228 = arith.subf %222, %227 : vector<1x32xf32>
    %229 = arith.mulf %228, %228 : vector<1x32xf32>
    %cst_94 = arith.constant dense<0.000000e+00> : vector<1xf32>
    %230 = vector.multi_reduction <add>, %229, %cst_94 [1] : vector<1x32xf32> to vector<1xf32>
    %231 = vector.shape_cast %230 : vector<1xf32> to vector<1x1xf32>
    %cst_95 = arith.constant 3.200000e+01 : f32
    %232 = vector.broadcast %cst_95 : f32 to vector<1x1xf32>
    %233 = arith.divf %231, %232 : vector<1x1xf32>
    %cst_96 = arith.constant 9.99999974E-6 : f32
    %234 = vector.broadcast %cst_96 : f32 to vector<1x1xf32>
    %235 = arith.addf %233, %234 : vector<1x1xf32>
    %236 = math.rsqrt %235 : vector<1x1xf32>
    %237 = vector.broadcast %236 : vector<1x1xf32> to vector<1x32xf32>
    %238 = arith.mulf %228, %237 : vector<1x32xf32>
    %239 = arith.mulf %0, %238 : vector<1x32xf32>
    %240 = arith.addf %239, %1 : vector<1x32xf32>
    %c0_97 = arith.constant 0 : index
    %c352_98 = arith.constant 352 : index
    %241 = vector.load %arg4[%c0_97, %c352_98] : memref<1x512xf32, #tpu.memory_space<vmem>>, vector<1x32xf32>
    tpu.vector_store %arg4[%c0_97, %c352_98], %240 {strides = array<i32>} : memref<1x512xf32, #tpu.memory_space<vmem>>, vector<1x32xf32>,
    %c0_99 = arith.constant 0 : index
    %c384 = arith.constant 384 : index
    %242 = vector.load %arg1[%c0_99, %c384] : memref<1x512xf32, #tpu.memory_space<vmem>>, vector<1x32xf32>
    %cst_100 = arith.constant dense<0.000000e+00> : vector<1xf32>
    %243 = vector.multi_reduction <add>, %242, %cst_100 [1] : vector<1x32xf32> to vector<1xf32>
    %244 = vector.shape_cast %243 : vector<1xf32> to vector<1x1xf32>
    %cst_101 = arith.constant 3.200000e+01 : f32
    %245 = vector.broadcast %cst_101 : f32 to vector<1x1xf32>
    %246 = arith.divf %244, %245 : vector<1x1xf32>
    %247 = vector.broadcast %246 : vector<1x1xf32> to vector<1x32xf32>
    %248 = arith.subf %242, %247 : vector<1x32xf32>
    %249 = arith.mulf %248, %248 : vector<1x32xf32>
    %cst_102 = arith.constant dense<0.000000e+00> : vector<1xf32>
    %250 = vector.multi_reduction <add>, %249, %cst_102 [1] : vector<1x32xf32> to vector<1xf32>
    %251 = vector.shape_cast %250 : vector<1xf32> to vector<1x1xf32>
    %cst_103 = arith.constant 3.200000e+01 : f32
    %252 = vector.broadcast %cst_103 : f32 to vector<1x1xf32>
    %253 = arith.divf %251, %252 : vector<1x1xf32>
    %cst_104 = arith.constant 9.99999974E-6 : f32
    %254 = vector.broadcast %cst_104 : f32 to vector<1x1xf32>
    %255 = arith.addf %253, %254 : vector<1x1xf32>
    %256 = math.rsqrt %255 : vector<1x1xf32>
    %257 = vector.broadcast %256 : vector<1x1xf32> to vector<1x32xf32>
    %258 = arith.mulf %248, %257 : vector<1x32xf32>
    %259 = arith.mulf %0, %258 : vector<1x32xf32>
    %260 = arith.addf %259, %1 : vector<1x32xf32>
    %c0_105 = arith.constant 0 : index
    %c384_106 = arith.constant 384 : index
    %261 = vector.load %arg4[%c0_105, %c384_106] : memref<1x512xf32, #tpu.memory_space<vmem>>, vector<1x32xf32>
    tpu.vector_store %arg4[%c0_105, %c384_106], %260 {strides = array<i32>} : memref<1x512xf32, #tpu.memory_space<vmem>>, vector<1x32xf32>,
    %c0_107 = arith.constant 0 : index
    %c416 = arith.constant 416 : index
    %262 = vector.load %arg1[%c0_107, %c416] : memref<1x512xf32, #tpu.memory_space<vmem>>, vector<1x32xf32>
    %cst_108 = arith.constant dense<0.000000e+00> : vector<1xf32>
    %263 = vector.multi_reduction <add>, %262, %cst_108 [1] : vector<1x32xf32> to vector<1xf32>
    %264 = vector.shape_cast %263 : vector<1xf32> to vector<1x1xf32>
    %cst_109 = arith.constant 3.200000e+01 : f32
    %265 = vector.broadcast %cst_109 : f32 to vector<1x1xf32>
    %266 = arith.divf %264, %265 : vector<1x1xf32>
    %267 = vector.broadcast %266 : vector<1x1xf32> to vector<1x32xf32>
    %268 = arith.subf %262, %267 : vector<1x32xf32>
    %269 = arith.mulf %268, %268 : vector<1x32xf32>
    %cst_110 = arith.constant dense<0.000000e+00> : vector<1xf32>
    %270 = vector.multi_reduction <add>, %269, %cst_110 [1] : vector<1x32xf32> to vector<1xf32>
    %271 = vector.shape_cast %270 : vector<1xf32> to vector<1x1xf32>
    %cst_111 = arith.constant 3.200000e+01 : f32
    %272 = vector.broadcast %cst_111 : f32 to vector<1x1xf32>
    %273 = arith.divf %271, %272 : vector<1x1xf32>
    %cst_112 = arith.constant 9.99999974E-6 : f32
    %274 = vector.broadcast %cst_112 : f32 to vector<1x1xf32>
    %275 = arith.addf %273, %274 : vector<1x1xf32>
    %276 = math.rsqrt %275 : vector<1x1xf32>
    %277 = vector.broadcast %276 : vector<1x1xf32> to vector<1x32xf32>
    %278 = arith.mulf %268, %277 : vector<1x32xf32>
    %279 = arith.mulf %0, %278 : vector<1x32xf32>
    %280 = arith.addf %279, %1 : vector<1x32xf32>
    %c0_113 = arith.constant 0 : index
    %c416_114 = arith.constant 416 : index
    %281 = vector.load %arg4[%c0_113, %c416_114] : memref<1x512xf32, #tpu.memory_space<vmem>>, vector<1x32xf32>
    tpu.vector_store %arg4[%c0_113, %c416_114], %280 {strides = array<i32>} : memref<1x512xf32, #tpu.memory_space<vmem>>, vector<1x32xf32>,
    %c0_115 = arith.constant 0 : index
    %c448 = arith.constant 448 : index
    %282 = vector.load %arg1[%c0_115, %c448] : memref<1x512xf32, #tpu.memory_space<vmem>>, vector<1x32xf32>
    %cst_116 = arith.constant dense<0.000000e+00> : vector<1xf32>
    %283 = vector.multi_reduction <add>, %282, %cst_116 [1] : vector<1x32xf32> to vector<1xf32>
    %284 = vector.shape_cast %283 : vector<1xf32> to vector<1x1xf32>
    %cst_117 = arith.constant 3.200000e+01 : f32
    %285 = vector.broadcast %cst_117 : f32 to vector<1x1xf32>
    %286 = arith.divf %284, %285 : vector<1x1xf32>
    %287 = vector.broadcast %286 : vector<1x1xf32> to vector<1x32xf32>
    %288 = arith.subf %282, %287 : vector<1x32xf32>
    %289 = arith.mulf %288, %288 : vector<1x32xf32>
    %cst_118 = arith.constant dense<0.000000e+00> : vector<1xf32>
    %290 = vector.multi_reduction <add>, %289, %cst_118 [1] : vector<1x32xf32> to vector<1xf32>
    %291 = vector.shape_cast %290 : vector<1xf32> to vector<1x1xf32>
    %cst_119 = arith.constant 3.200000e+01 : f32
    %292 = vector.broadcast %cst_119 : f32 to vector<1x1xf32>
    %293 = arith.divf %291, %292 : vector<1x1xf32>
    %cst_120 = arith.constant 9.99999974E-6 : f32
    %294 = vector.broadcast %cst_120 : f32 to vector<1x1xf32>
    %295 = arith.addf %293, %294 : vector<1x1xf32>
    %296 = math.rsqrt %295 : vector<1x1xf32>
    %297 = vector.broadcast %296 : vector<1x1xf32> to vector<1x32xf32>
    %298 = arith.mulf %288, %297 : vector<1x32xf32>
    %299 = arith.mulf %0, %298 : vector<1x32xf32>
    %300 = arith.addf %299, %1 : vector<1x32xf32>
    %c0_121 = arith.constant 0 : index
    %c448_122 = arith.constant 448 : index
    %301 = vector.load %arg4[%c0_121, %c448_122] : memref<1x512xf32, #tpu.memory_space<vmem>>, vector<1x32xf32>
    tpu.vector_store %arg4[%c0_121, %c448_122], %300 {strides = array<i32>} : memref<1x512xf32, #tpu.memory_space<vmem>>, vector<1x32xf32>,
    %c0_123 = arith.constant 0 : index
    %c480 = arith.constant 480 : index
    %302 = vector.load %arg1[%c0_123, %c480] : memref<1x512xf32, #tpu.memory_space<vmem>>, vector<1x32xf32>
    %cst_124 = arith.constant dense<0.000000e+00> : vector<1xf32>
    %303 = vector.multi_reduction <add>, %302, %cst_124 [1] : vector<1x32xf32> to vector<1xf32>
    %304 = vector.shape_cast %303 : vector<1xf32> to vector<1x1xf32>
    %cst_125 = arith.constant 3.200000e+01 : f32
    %305 = vector.broadcast %cst_125 : f32 to vector<1x1xf32>
    %306 = arith.divf %304, %305 : vector<1x1xf32>
    %307 = vector.broadcast %306 : vector<1x1xf32> to vector<1x32xf32>
    %308 = arith.subf %302, %307 : vector<1x32xf32>
    %309 = arith.mulf %308, %308 : vector<1x32xf32>
    %cst_126 = arith.constant dense<0.000000e+00> : vector<1xf32>
    %310 = vector.multi_reduction <add>, %309, %cst_126 [1] : vector<1x32xf32> to vector<1xf32>
    %311 = vector.shape_cast %310 : vector<1xf32> to vector<1x1xf32>
    %cst_127 = arith.constant 3.200000e+01 : f32
    %312 = vector.broadcast %cst_127 : f32 to vector<1x1xf32>
    %313 = arith.divf %311, %312 : vector<1x1xf32>
    %cst_128 = arith.constant 9.99999974E-6 : f32
    %314 = vector.broadcast %cst_128 : f32 to vector<1x1xf32>
    %315 = arith.addf %313, %314 : vector<1x1xf32>
    %316 = math.rsqrt %315 : vector<1x1xf32>
    %317 = vector.broadcast %316 : vector<1x1xf32> to vector<1x32xf32>
    %318 = arith.mulf %308, %317 : vector<1x32xf32>
    %319 = arith.mulf %0, %318 : vector<1x32xf32>
    %320 = arith.addf %319, %1 : vector<1x32xf32>
    %c0_129 = arith.constant 0 : index
    %c480_130 = arith.constant 480 : index
    %321 = vector.load %arg4[%c0_129, %c480_130] : memref<1x512xf32, #tpu.memory_space<vmem>>, vector<1x32xf32>
    tpu.vector_store %arg4[%c0_129, %c480_130], %320 {strides = array<i32>} : memref<1x512xf32, #tpu.memory_space<vmem>>, vector<1x32xf32>,
    return
  }
  func.func @transform_0(%arg0: i32) -> (i32, i32) {
    %c0_i32 = arith.constant 0 : i32
    %c0_i32_0 = arith.constant 0 : i32
    return %arg0, %c0_i32 : i32, i32
  }
  func.func @transform_1(%arg0: i32) -> (i32, i32) {
    %c0_i32 = arith.constant 0 : i32
    %c0_i32_0 = arith.constant 0 : i32
    %c0_i32_1 = arith.constant 0 : i32
    return %c0_i32, %c0_i32_0 : i32, i32
  }
  func.func @transform_2(%arg0: i32) -> (i32, i32) {
    %c0_i32 = arith.constant 0 : i32
    %c0_i32_0 = arith.constant 0 : i32
    %c0_i32_1 = arith.constant 0 : i32
    return %c0_i32, %c0_i32_0 : i32, i32
  }
  func.func @transform_3(%arg0: i32) -> (i32, i32) {
    %c0_i32 = arith.constant 0 : i32
    %c0_i32_0 = arith.constant 0 : i32
    return %arg0, %c0_i32 : i32, i32
  }
}

</mosaic_0001>

<llo_original>
// kernel: tpu_custom_call.1
$region0: #{tpu_custom_call.1}
  #allocation0 [shape = 'u32[]', space=smem, size = 0x4, offset = 0x4, fixed_abs, tag = 'smem constant byte address 0x4 - core index']
  #allocation1 [shape = 'u32[72,128]{1,0:T(1,128)}', space=vmem, size = 0x9000, scoped, tag = 'internal scratch']
  %s0 = inlined_call_operand.hbm [shape: f32[1,512], index: 0, kind: input, shape index: {}]
  %s1 = inlined_call_operand.hbm [shape: f32[1,32], index: 1, kind: input, shape index: {}]
  %s2 = inlined_call_operand.vmem [shape: f32[1,32], index: 2, kind: input, shape index: {}]
  %s3 = inlined_call_operand.hbm [shape: f32[1,512], index: 3, kind: output, shape index: {}]
  %s4 = sld [smem:[#allocation0]]
  $region30: #{tpu_custom_call.1} parent=0
    _
  %s6 = ssub.s32 1, %s4
  %s7 = scalar_select 0, %s6, %s4
  $region1: #{tpu_custom_call.1} parent=0
    #allocation2 [shape = 'u8[2048]{0}', space=vmem, size = 0x800, scoped, tag = 'input window, operand 0, single buffered']
    #allocation3 [shape = 's32[1]{0}', space=sflag, size = 0x4, scoped, tag = 'scoped memory for tpu_custom_call.1']
    #allocation4 [shape = 's32[1]{0}', space=sflag, size = 0x4, scoped, tag = 'scoped memory for tpu_custom_call.1']
    #allocation5 [shape = 'u8[512]{0}', space=vmem, size = 0x400, scoped, tag = 'input window, operand 1, single buffered']
    #allocation6 [shape = 's32[1]{0}', space=sflag, size = 0x4, scoped, tag = 'scoped memory for tpu_custom_call.1']
    #allocation7 [shape = 'u8[2048]{0}', space=vmem, size = 0x800, scoped, tag = 'output window, operand 0, single buffered']
    %8 = vsyncpa [#allocation3], 0
    %9 = vsyncpa [#allocation6], 0
    %10 = vsyncpa [#allocation4], 0
    // Predicated region
    $region2: #{tpu_custom_call.1} parent=1 // pred_check
      _
    $region3: #{tpu_custom_call.1} parent=1 // pred_check_branch
      %12 = sbr.rel (0) target = $region5
    $region4: #{tpu_custom_call.1} parent=1 // pred_region
      %14 = vsyncadd [#allocation3], 0
      %s16 = sshll.u32 %s0, 4
      %s17 = int_to_ptr.hbm [resolvable:$true] %s16
      %s18 = sshll.u32 [#allocation2], 4
      %s19 = int_to_ptr.vmem [resolvable:$true] %s18
      %21 = dma.hbm_to_vmem [thread:$0]  %s17, 64, %s19, [#allocation3]
    $region5: #{tpu_custom_call.1} parent=1 // pred_fallthru
      _
    // Predicated region
    $region6: #{tpu_custom_call.1} parent=1 // pred_check
      _
    $region7: #{tpu_custom_call.1} parent=1 // pred_check_branch
      %23 = sbr.rel (0) target = $region9
    $region8: #{tpu_custom_call.1} parent=1 // pred_region
      %25 = vsyncadd [#allocation6], 0
      %s27 = sshll.u32 %s1, 4
      %s28 = int_to_ptr.hbm [resolvable:$true] %s27
      %s29 = sshll.u32 [#allocation5], 4
      %s30 = int_to_ptr.vmem [resolvable:$true] %s29
      %32 = dma.hbm_to_vmem [thread:$0]  %s28, 16, %s30, [#allocation6]
    $region9: #{tpu_custom_call.1} parent=1 // pred_fallthru
      _
    // Predicated region
    $region10: #{tpu_custom_call.1} parent=1 // pred_check
      _
    $region11: #{tpu_custom_call.1} parent=1 // pred_check_branch
      %34 = sbr.rel (0) target = $region13
    $region12: #{tpu_custom_call.1} parent=1 // pred_region
      _
    $region13: #{tpu_custom_call.1} parent=1 // pred_fallthru
      _
    // Predicated region
    $region14: #{tpu_custom_call.1} parent=1 // pred_check
      _
    $region15: #{tpu_custom_call.1} parent=1 // pred_check_branch
      %36 = sbr.rel (0) target = $region17
    $region16: #{tpu_custom_call.1} parent=1 // pred_region
      %38 = dma.done [#allocation3], 64
    $region17: #{tpu_custom_call.1} parent=1 // pred_fallthru
      _
    // Predicated region
    $region18: #{tpu_custom_call.1} parent=1 // pred_check
      _
    $region19: #{tpu_custom_call.1} parent=1 // pred_check_branch
      %40 = sbr.rel (0) target = $region21
    $region20: #{tpu_custom_call.1} parent=1 // pred_region
      %42 = dma.done [#allocation6], 16
    $region21: #{tpu_custom_call.1} parent=1 // pred_fallthru
      _
    %v43 = vld [vmem:[#allocation5] sm:$0x1]
    %v44 = vld [vmem:[%s2] sm:$0x1]
    %v45 = vld [vmem:[#allocation2] sm:$0x1]
    %vm46 = vcmask 253952
    %v47 = vsel %vm46, %v45, 0.0
    %48 = vadd.xlane.f32.xlu0 %v47
    %v49 = vpop.xlane.xlu0 %48
    %v50 = vrcp.pop 32.0
    %v51 = vmul.f32 32.0, %v50
    %v52 = vsub.f32 1.0, %v51
    %v53 = vmul.f32 %v50, %v52
    %v54 = vadd.f32 %v50, %v53
    %vm55 = vweird.f32 %v50
    %v56 = vsel %vm55, %v50, %v54
    %v57 = vmul.f32 %v49, %v56
    %v58 = vsub.f32 %v45, %v57
    %v59 = vmul.f32 %v58, %v58
    %v60 = vsel %vm46, %v59, 0.0
    %61 = vadd.xlane.f32.xlu0 %v60
    %v62 = vpop.xlane.xlu0 %61
    %v63 = vmul.f32 %v62, %v56
    %v64 = vadd.f32 %v63, 1e-05
    %v65 = vrsqrt.pop %v64
    %v66 = vmul.f32 %v65, %v64
    %v67 = vmul.f32 %v66, %v65
    %v68 = vmul.f32 0.5, %v67
    %v69 = vsub.f32 1.5, %v68
    %v70 = vmul.f32 %v65, %v69
    %vm71 = vweird.f32 %v64
    %vm72 = vweird.f32 %v65
    %vm73 = vmor %vm71, %vm72
    %v74 = vsel %vm73, %v65, %v70
    %v75 = vmul.f32 %v58, %v74
    %v76 = vmul.f32 %v43, %v75
    %v77 = vadd.f32 %v76, %v44
    %v78 = vlaneseq
    %vm79 = vcmp.ge.s32.totalorder %v78, 0
    %vm80 = vcmp.lt.s32.totalorder %v78, 32
    %vm81 = vmand %vm79, %vm80
    %82 = vst.msk [vmem:[#allocation7] sm:$0x1] %vm81, %v77
    %v83 = vld [vmem:[#allocation2] sm:$0x1]
    %v85 = vperm.slane %v83, 0
    %86 = vrot.lane.b32.xlu0 %v85, 96
    %v87 = vpop.permute.xlu0 %86
    %v89 = vsel %vm46, %v87, 0.0
    %90 = vadd.xlane.f32.xlu0 %v89
    %v91 = vpop.xlane.xlu0 %90
    %v92 = vmul.f32 %v91, %v56
    %v93 = vsub.f32 %v83, %v92
    %v94 = vmul.f32 %v93, %v93
    %v96 = vperm.slane %v94, 0
    %97 = vrot.lane.b32.xlu0 %v96, 96
    %v98 = vpop.permute.xlu0 %97
    %v100 = vsel %vm46, %v98, 0.0
    %101 = vadd.xlane.f32.xlu0 %v100
    %v102 = vpop.xlane.xlu0 %101
    %v103 = vmul.f32 %v102, %v56
    %v104 = vadd.f32 %v103, 1e-05
    %v105 = vrsqrt.pop %v104
    %v106 = vmul.f32 %v105, %v104
    %v107 = vmul.f32 %v106, %v105
    %v108 = vmul.f32 0.5, %v107
    %v109 = vsub.f32 1.5, %v108
    %v110 = vmul.f32 %v105, %v109
    %vm111 = vweird.f32 %v104
    %vm112 = vweird.f32 %v105
    %vm113 = vmor %vm111, %vm112
    %v114 = vsel %vm113, %v105, %v110
    %v115 = vmul.f32 %v93, %v114
    %117 = vrot.lane.b32.xlu0 %v115, 96
    %v118 = vpop.permute.xlu0 %117
    %v120 = vmul.f32 %v43, %v118
    %v121 = vadd.f32 %v120, %v44
    %123 = vrot.lane.b32.xlu0 %v121, 32
    %v124 = vpop.permute.xlu0 %123
    %vm126 = vcmp.ge.s32.totalorder %v78, 32
    %vm127 = vcmp.lt.s32.totalorder %v78, 64
    %vm128 = vmand %vm126, %vm127
    %129 = vst.msk [vmem:[#allocation7] sm:$0x1] %vm128, %v124
    %v130 = vld [vmem:[#allocation2] sm:$0x1]
    %v132 = vperm.slane %v130, 0
    %133 = vrot.lane.b32.xlu0 %v132, 64
    %v134 = vpop.permute.xlu0 %133
    %v136 = vsel %vm46, %v134, 0.0
    %137 = vadd.xlane.f32.xlu0 %v136
    %v138 = vpop.xlane.xlu0 %137
    %v139 = vmul.f32 %v138, %v56
    %v140 = vsub.f32 %v130, %v139
    %v141 = vmul.f32 %v140, %v140
    %v143 = vperm.slane %v141, 0
    %144 = vrot.lane.b32.xlu0 %v143, 64
    %v145 = vpop.permute.xlu0 %144
    %v147 = vsel %vm46, %v145, 0.0
    %148 = vadd.xlane.f32.xlu0 %v147
    %v149 = vpop.xlane.xlu0 %148
    %v150 = vmul.f32 %v149, %v56
    %v151 = vadd.f32 %v150, 1e-05
    %v152 = vrsqrt.pop %v151
    %v153 = vmul.f32 %v152, %v151
    %v154 = vmul.f32 %v153, %v152
    %v155 = vmul.f32 0.5, %v154
    %v156 = vsub.f32 1.5, %v155
    %v157 = vmul.f32 %v152, %v156
    %vm158 = vweird.f32 %v151
    %vm159 = vweird.f32 %v152
    %vm160 = vmor %vm158, %vm159
    %v161 = vsel %vm160, %v152, %v157
    %v162 = vmul.f32 %v140, %v161
    %164 = vrot.lane.b32.xlu0 %v162, 64
    %v165 = vpop.permute.xlu0 %164
    %v167 = vmul.f32 %v43, %v165
    %v168 = vadd.f32 %v167, %v44
    %170 = vrot.lane.b32.xlu0 %v168, 64
    %v171 = vpop.permute.xlu0 %170
    %vm173 = vcmp.ge.s32.totalorder %v78, 64
    %vm174 = vcmp.lt.s32.totalorder %v78, 96
    %vm175 = vmand %vm173, %vm174
    %176 = vst.msk [vmem:[#allocation7] sm:$0x1] %vm175, %v171
    %v177 = vld [vmem:[#allocation2] sm:$0x1]
    %v179 = vperm.slane %v177, 0
    %180 = vrot.lane.b32.xlu0 %v179, 32
    %v181 = vpop.permute.xlu0 %180
    %v183 = vsel %vm46, %v181, 0.0
    %184 = vadd.xlane.f32.xlu0 %v183
    %v185 = vpop.xlane.xlu0 %184
    %v186 = vmul.f32 %v185, %v56
    %v187 = vsub.f32 %v177, %v186
    %v188 = vmul.f32 %v187, %v187
    %v190 = vperm.slane %v188, 0
    %191 = vrot.lane.b32.xlu0 %v190, 32
    %v192 = vpop.permute.xlu0 %191
    %v194 = vsel %vm46, %v192, 0.0
    %195 = vadd.xlane.f32.xlu0 %v194
    %v196 = vpop.xlane.xlu0 %195
    %v197 = vmul.f32 %v196, %v56
    %v198 = vadd.f32 %v197, 1e-05
    %v199 = vrsqrt.pop %v198
    %v200 = vmul.f32 %v199, %v198
    %v201 = vmul.f32 %v200, %v199
    %v202 = vmul.f32 0.5, %v201
    %v203 = vsub.f32 1.5, %v202
    %v204 = vmul.f32 %v199, %v203
    %vm205 = vweird.f32 %v198
    %vm206 = vweird.f32 %v199
    %vm207 = vmor %vm205, %vm206
    %v208 = vsel %vm207, %v199, %v204
    %v209 = vmul.f32 %v187, %v208
    %211 = vrot.lane.b32.xlu0 %v209, 32
    %v212 = vpop.permute.xlu0 %211
    %v214 = vmul.f32 %v43, %v212
    %v215 = vadd.f32 %v214, %v44
    %217 = vrot.lane.b32.xlu0 %v215, 96
    %v218 = vpop.permute.xlu0 %217
    %vm220 = vcmp.ge.s32.totalorder %v78, 96
    %vm221 = vcmp.lt.s32.totalorder %v78, 128
    %vm222 = vmand %vm220, %vm221
    %223 = vst.msk [vmem:[#allocation7] sm:$0x1] %vm222, %v218
    %v224 = vld [vmem:[#allocation2 + $0x1] sm:$0x1]
    %v225 = vsel %vm46, %v224, 0.0
    %226 = vadd.xlane.f32.xlu0 %v225
    %v227 = vpop.xlane.xlu0 %226
    %v228 = vmul.f32 %v227, %v56
    %v229 = vsub.f32 %v224, %v228
    %v230 = vmul.f32 %v229, %v229
    %v231 = vsel %vm46, %v230, 0.0
    %232 = vadd.xlane.f32.xlu0 %v231
    %v233 = vpop.xlane.xlu0 %232
    %v234 = vmul.f32 %v233, %v56
    %v235 = vadd.f32 %v234, 1e-05
    %v236 = vrsqrt.pop %v235
    %v237 = vmul.f32 %v236, %v235
    %v238 = vmul.f32 %v237, %v236
    %v239 = vmul.f32 0.5, %v238
    %v240 = vsub.f32 1.5, %v239
    %v241 = vmul.f32 %v236, %v240
    %vm242 = vweird.f32 %v235
    %vm243 = vweird.f32 %v236
    %vm244 = vmor %vm242, %vm243
    %v245 = vsel %vm244, %v236, %v241
    %v246 = vmul.f32 %v229, %v245
    %v247 = vmul.f32 %v43, %v246
    %v248 = vadd.f32 %v247, %v44
    %249 = vst.msk [vmem:[#allocation7 + $0x1] sm:$0x1] %vm81, %v248
    %v250 = vld [vmem:[#allocation2 + $0x1] sm:$0x1]
    %v252 = vperm.slane %v250, 0
    %253 = vrot.lane.b32.xlu0 %v252, 96
    %v254 = vpop.permute.xlu0 %253
    %v256 = vsel %vm46, %v254, 0.0
    %257 = vadd.xlane.f32.xlu0 %v256
    %v258 = vpop.xlane.xlu0 %257
    %v259 = vmul.f32 %v258, %v56
    %v260 = vsub.f32 %v250, %v259
    %v261 = vmul.f32 %v260, %v260
    %v263 = vperm.slane %v261, 0
    %264 = vrot.lane.b32.xlu0 %v263, 96
    %v265 = vpop.permute.xlu0 %264
    %v267 = vsel %vm46, %v265, 0.0
    %268 = vadd.xlane.f32.xlu0 %v267
    %v269 = vpop.xlane.xlu0 %268
    %v270 = vmul.f32 %v269, %v56
    %v271 = vadd.f32 %v270, 1e-05
    %v272 = vrsqrt.pop %v271
    %v273 = vmul.f32 %v272, %v271
    %v274 = vmul.f32 %v273, %v272
    %v275 = vmul.f32 0.5, %v274
    %v276 = vsub.f32 1.5, %v275
    %v277 = vmul.f32 %v272, %v276
    %vm278 = vweird.f32 %v271
    %vm279 = vweird.f32 %v272
    %vm280 = vmor %vm278, %vm279
    %v281 = vsel %vm280, %v272, %v277
    %v282 = vmul.f32 %v260, %v281
    %284 = vrot.lane.b32.xlu0 %v282, 96
    %v285 = vpop.permute.xlu0 %284
    %v287 = vmul.f32 %v43, %v285
    %v288 = vadd.f32 %v287, %v44
    %290 = vrot.lane.b32.xlu0 %v288, 32
    %v291 = vpop.permute.xlu0 %290
    %293 = vst.msk [vmem:[#allocation7 + $0x1] sm:$0x1] %vm128, %v291
    %v294 = vld [vmem:[#allocation2 + $0x1] sm:$0x1]
    %v296 = vperm.slane %v294, 0
    %297 = vrot.lane.b32.xlu0 %v296, 64
    %v298 = vpop.permute.xlu0 %297
    %v300 = vsel %vm46, %v298, 0.0
    %301 = vadd.xlane.f32.xlu0 %v300
    %v302 = vpop.xlane.xlu0 %301
    %v303 = vmul.f32 %v302, %v56
    %v304 = vsub.f32 %v294, %v303
    %v305 = vmul.f32 %v304, %v304
    %v307 = vperm.slane %v305, 0
    %308 = vrot.lane.b32.xlu0 %v307, 64
    %v309 = vpop.permute.xlu0 %308
    %v311 = vsel %vm46, %v309, 0.0
    %312 = vadd.xlane.f32.xlu0 %v311
    %v313 = vpop.xlane.xlu0 %312
    %v314 = vmul.f32 %v313, %v56
    %v315 = vadd.f32 %v314, 1e-05
    %v316 = vrsqrt.pop %v315
    %v317 = vmul.f32 %v316, %v315
    %v318 = vmul.f32 %v317, %v316
    %v319 = vmul.f32 0.5, %v318
    %v320 = vsub.f32 1.5, %v319
    %v321 = vmul.f32 %v316, %v320
    %vm322 = vweird.f32 %v315
    %vm323 = vweird.f32 %v316
    %vm324 = vmor %vm322, %vm323
    %v325 = vsel %vm324, %v316, %v321
    %v326 = vmul.f32 %v304, %v325
    %328 = vrot.lane.b32.xlu0 %v326, 64
    %v329 = vpop.permute.xlu0 %328
    %v331 = vmul.f32 %v43, %v329
    %v332 = vadd.f32 %v331, %v44
    %334 = vrot.lane.b32.xlu0 %v332, 64
    %v335 = vpop.permute.xlu0 %334
    %337 = vst.msk [vmem:[#allocation7 + $0x1] sm:$0x1] %vm175, %v335
    %v338 = vld [vmem:[#allocation2 + $0x1] sm:$0x1]
    %v340 = vperm.slane %v338, 0
    %341 = vrot.lane.b32.xlu0 %v340, 32
    %v342 = vpop.permute.xlu0 %341
    %v344 = vsel %vm46, %v342, 0.0
    %345 = vadd.xlane.f32.xlu0 %v344
    %v346 = vpop.xlane.xlu0 %345
    %v347 = vmul.f32 %v346, %v56
    %v348 = vsub.f32 %v338, %v347
    %v349 = vmul.f32 %v348, %v348
    %v351 = vperm.slane %v349, 0
    %352 = vrot.lane.b32.xlu0 %v351, 32
    %v353 = vpop.permute.xlu0 %352
    %v355 = vsel %vm46, %v353, 0.0
    %356 = vadd.xlane.f32.xlu0 %v355
    %v357 = vpop.xlane.xlu0 %356
    %v358 = vmul.f32 %v357, %v56
    %v359 = vadd.f32 %v358, 1e-05
    %v360 = vrsqrt.pop %v359
    %v361 = vmul.f32 %v360, %v359
    %v362 = vmul.f32 %v361, %v360
    %v363 = vmul.f32 0.5, %v362
    %v364 = vsub.f32 1.5, %v363
    %v365 = vmul.f32 %v360, %v364
    %vm366 = vweird.f32 %v359
    %vm367 = vweird.f32 %v360
    %vm368 = vmor %vm366, %vm367
    %v369 = vsel %vm368, %v360, %v365
    %v370 = vmul.f32 %v348, %v369
    %372 = vrot.lane.b32.xlu0 %v370, 32
    %v373 = vpop.permute.xlu0 %372
    %v375 = vmul.f32 %v43, %v373
    %v376 = vadd.f32 %v375, %v44
    %378 = vrot.lane.b32.xlu0 %v376, 96
    %v379 = vpop.permute.xlu0 %378
    %381 = vst.msk [vmem:[#allocation7 + $0x1] sm:$0x1] %vm222, %v379
    %v382 = vld [vmem:[#allocation2 + $0x2] sm:$0x1]
    %v383 = vsel %vm46, %v382, 0.0
    %384 = vadd.xlane.f32.xlu0 %v383
    %v385 = vpop.xlane.xlu0 %384
    %v386 = vmul.f32 %v385, %v56
    %v387 = vsub.f32 %v382, %v386
    %v388 = vmul.f32 %v387, %v387
    %v389 = vsel %vm46, %v388, 0.0
    %390 = vadd.xlane.f32.xlu0 %v389
    %v391 = vpop.xlane.xlu0 %390
    %v392 = vmul.f32 %v391, %v56
    %v393 = vadd.f32 %v392, 1e-05
    %v394 = vrsqrt.pop %v393
    %v395 = vmul.f32 %v394, %v393
    %v396 = vmul.f32 %v395, %v394
    %v397 = vmul.f32 0.5, %v396
    %v398 = vsub.f32 1.5, %v397
    %v399 = vmul.f32 %v394, %v398
    %vm400 = vweird.f32 %v393
    %vm401 = vweird.f32 %v394
    %vm402 = vmor %vm400, %vm401
    %v403 = vsel %vm402, %v394, %v399
    %v404 = vmul.f32 %v387, %v403
    %v405 = vmul.f32 %v43, %v404
    %v406 = vadd.f32 %v405, %v44
    %407 = vst.msk [vmem:[#allocation7 + $0x2] sm:$0x1] %vm81, %v406
    %v408 = vld [vmem:[#allocation2 + $0x2] sm:$0x1]
    %v410 = vperm.slane %v408, 0
    %411 = vrot.lane.b32.xlu0 %v410, 96
    %v412 = vpop.permute.xlu0 %411
    %v414 = vsel %vm46, %v412, 0.0
    %415 = vadd.xlane.f32.xlu0 %v414
    %v416 = vpop.xlane.xlu0 %415
    %v417 = vmul.f32 %v416, %v56
    %v418 = vsub.f32 %v408, %v417
    %v419 = vmul.f32 %v418, %v418
    %v421 = vperm.slane %v419, 0
    %422 = vrot.lane.b32.xlu0 %v421, 96
    %v423 = vpop.permute.xlu0 %422
    %v425 = vsel %vm46, %v423, 0.0
    %426 = vadd.xlane.f32.xlu0 %v425
    %v427 = vpop.xlane.xlu0 %426
    %v428 = vmul.f32 %v427, %v56
    %v429 = vadd.f32 %v428, 1e-05
    %v430 = vrsqrt.pop %v429
    %v431 = vmul.f32 %v430, %v429
    %v432 = vmul.f32 %v431, %v430
    %v433 = vmul.f32 0.5, %v432
    %v434 = vsub.f32 1.5, %v433
    %v435 = vmul.f32 %v430, %v434
    %vm436 = vweird.f32 %v429
    %vm437 = vweird.f32 %v430
    %vm438 = vmor %vm436, %vm437
    %v439 = vsel %vm438, %v430, %v435
    %v440 = vmul.f32 %v418, %v439
    %442 = vrot.lane.b32.xlu0 %v440, 96
    %v443 = vpop.permute.xlu0 %442
    %v445 = vmul.f32 %v43, %v443
    %v446 = vadd.f32 %v445, %v44
    %448 = vrot.lane.b32.xlu0 %v446, 32
    %v449 = vpop.permute.xlu0 %448
    %451 = vst.msk [vmem:[#allocation7 + $0x2] sm:$0x1] %vm128, %v449
    %v452 = vld [vmem:[#allocation2 + $0x2] sm:$0x1]
    %v454 = vperm.slane %v452, 0
    %455 = vrot.lane.b32.xlu0 %v454, 64
    %v456 = vpop.permute.xlu0 %455
    %v458 = vsel %vm46, %v456, 0.0
    %459 = vadd.xlane.f32.xlu0 %v458
    %v460 = vpop.xlane.xlu0 %459
    %v461 = vmul.f32 %v460, %v56
    %v462 = vsub.f32 %v452, %v461
    %v463 = vmul.f32 %v462, %v462
    %v465 = vperm.slane %v463, 0
    %466 = vrot.lane.b32.xlu0 %v465, 64
    %v467 = vpop.permute.xlu0 %466
    %v469 = vsel %vm46, %v467, 0.0
    %470 = vadd.xlane.f32.xlu0 %v469
    %v471 = vpop.xlane.xlu0 %470
    %v472 = vmul.f32 %v471, %v56
    %v473 = vadd.f32 %v472, 1e-05
    %v474 = vrsqrt.pop %v473
    %v475 = vmul.f32 %v474, %v473
    %v476 = vmul.f32 %v475, %v474
    %v477 = vmul.f32 0.5, %v476
    %v478 = vsub.f32 1.5, %v477
    %v479 = vmul.f32 %v474, %v478
    %vm480 = vweird.f32 %v473
    %vm481 = vweird.f32 %v474
    %vm482 = vmor %vm480, %vm481
    %v483 = vsel %vm482, %v474, %v479
    %v484 = vmul.f32 %v462, %v483
    %486 = vrot.lane.b32.xlu0 %v484, 64
    %v487 = vpop.permute.xlu0 %486
    %v489 = vmul.f32 %v43, %v487
    %v490 = vadd.f32 %v489, %v44
    %492 = vrot.lane.b32.xlu0 %v490, 64
    %v493 = vpop.permute.xlu0 %492
    %495 = vst.msk [vmem:[#allocation7 + $0x2] sm:$0x1] %vm175, %v493
    %v496 = vld [vmem:[#allocation2 + $0x2] sm:$0x1]
    %v498 = vperm.slane %v496, 0
    %499 = vrot.lane.b32.xlu0 %v498, 32
    %v500 = vpop.permute.xlu0 %499
    %v502 = vsel %vm46, %v500, 0.0
    %503 = vadd.xlane.f32.xlu0 %v502
    %v504 = vpop.xlane.xlu0 %503
    %v505 = vmul.f32 %v504, %v56
    %v506 = vsub.f32 %v496, %v505
    %v507 = vmul.f32 %v506, %v506
    %v509 = vperm.slane %v507, 0
    %510 = vrot.lane.b32.xlu0 %v509, 32
    %v511 = vpop.permute.xlu0 %510
    %v513 = vsel %vm46, %v511, 0.0
    %514 = vadd.xlane.f32.xlu0 %v513
    %v515 = vpop.xlane.xlu0 %514
    %v516 = vmul.f32 %v515, %v56
    %v517 = vadd.f32 %v516, 1e-05
    %v518 = vrsqrt.pop %v517
    %v519 = vmul.f32 %v518, %v517
    %v520 = vmul.f32 %v519, %v518
    %v521 = vmul.f32 0.5, %v520
    %v522 = vsub.f32 1.5, %v521
    %v523 = vmul.f32 %v518, %v522
    %vm524 = vweird.f32 %v517
    %vm525 = vweird.f32 %v518
    %vm526 = vmor %vm524, %vm525
    %v527 = vsel %vm526, %v518, %v523
    %v528 = vmul.f32 %v506, %v527
    %530 = vrot.lane.b32.xlu0 %v528, 32
    %v531 = vpop.permute.xlu0 %530
    %v533 = vmul.f32 %v43, %v531
    %v534 = vadd.f32 %v533, %v44
    %536 = vrot.lane.b32.xlu0 %v534, 96
    %v537 = vpop.permute.xlu0 %536
    %539 = vst.msk [vmem:[#allocation7 + $0x2] sm:$0x1] %vm222, %v537
    %v540 = vld [vmem:[#allocation2 + $0x3] sm:$0x1]
    %v541 = vsel %vm46, %v540, 0.0
    %542 = vadd.xlane.f32.xlu0 %v541
    %v543 = vpop.xlane.xlu0 %542
    %v544 = vmul.f32 %v543, %v56
    %v545 = vsub.f32 %v540, %v544
    %v546 = vmul.f32 %v545, %v545
    %v547 = vsel %vm46, %v546, 0.0
    %548 = vadd.xlane.f32.xlu0 %v547
    %v549 = vpop.xlane.xlu0 %548
    %v550 = vmul.f32 %v549, %v56
    %v551 = vadd.f32 %v550, 1e-05
    %v552 = vrsqrt.pop %v551
    %v553 = vmul.f32 %v552, %v551
    %v554 = vmul.f32 %v553, %v552
    %v555 = vmul.f32 0.5, %v554
    %v556 = vsub.f32 1.5, %v555
    %v557 = vmul.f32 %v552, %v556
    %vm558 = vweird.f32 %v551
    %vm559 = vweird.f32 %v552
    %vm560 = vmor %vm558, %vm559
    %v561 = vsel %vm560, %v552, %v557
    %v562 = vmul.f32 %v545, %v561
    %v563 = vmul.f32 %v43, %v562
    %v564 = vadd.f32 %v563, %v44
    %565 = vst.msk [vmem:[#allocation7 + $0x3] sm:$0x1] %vm81, %v564
    %v566 = vld [vmem:[#allocation2 + $0x3] sm:$0x1]
    %v568 = vperm.slane %v566, 0
    %569 = vrot.lane.b32.xlu0 %v568, 96
    %v570 = vpop.permute.xlu0 %569
    %v572 = vsel %vm46, %v570, 0.0
    %573 = vadd.xlane.f32.xlu0 %v572
    %v574 = vpop.xlane.xlu0 %573
    %v575 = vmul.f32 %v574, %v56
    %v576 = vsub.f32 %v566, %v575
    %v577 = vmul.f32 %v576, %v576
    %v579 = vperm.slane %v577, 0
    %580 = vrot.lane.b32.xlu0 %v579, 96
    %v581 = vpop.permute.xlu0 %580
    %v583 = vsel %vm46, %v581, 0.0
    %584 = vadd.xlane.f32.xlu0 %v583
    %v585 = vpop.xlane.xlu0 %584
    %v586 = vmul.f32 %v585, %v56
    %v587 = vadd.f32 %v586, 1e-05
    %v588 = vrsqrt.pop %v587
    %v589 = vmul.f32 %v588, %v587
    %v590 = vmul.f32 %v589, %v588
    %v591 = vmul.f32 0.5, %v590
    %v592 = vsub.f32 1.5, %v591
    %v593 = vmul.f32 %v588, %v592
    %vm594 = vweird.f32 %v587
    %vm595 = vweird.f32 %v588
    %vm596 = vmor %vm594, %vm595
    %v597 = vsel %vm596, %v588, %v593
    %v598 = vmul.f32 %v576, %v597
    %600 = vrot.lane.b32.xlu0 %v598, 96
    %v601 = vpop.permute.xlu0 %600
    %v603 = vmul.f32 %v43, %v601
    %v604 = vadd.f32 %v603, %v44
    %606 = vrot.lane.b32.xlu0 %v604, 32
    %v607 = vpop.permute.xlu0 %606
    %609 = vst.msk [vmem:[#allocation7 + $0x3] sm:$0x1] %vm128, %v607
    %v610 = vld [vmem:[#allocation2 + $0x3] sm:$0x1]
    %v612 = vperm.slane %v610, 0
    %613 = vrot.lane.b32.xlu0 %v612, 64
    %v614 = vpop.permute.xlu0 %613
    %v616 = vsel %vm46, %v614, 0.0
    %617 = vadd.xlane.f32.xlu0 %v616
    %v618 = vpop.xlane.xlu0 %617
    %v619 = vmul.f32 %v618, %v56
    %v620 = vsub.f32 %v610, %v619
    %v621 = vmul.f32 %v620, %v620
    %v623 = vperm.slane %v621, 0
    %624 = vrot.lane.b32.xlu0 %v623, 64
    %v625 = vpop.permute.xlu0 %624
    %v627 = vsel %vm46, %v625, 0.0
    %628 = vadd.xlane.f32.xlu0 %v627
    %v629 = vpop.xlane.xlu0 %628
    %v630 = vmul.f32 %v629, %v56
    %v631 = vadd.f32 %v630, 1e-05
    %v632 = vrsqrt.pop %v631
    %v633 = vmul.f32 %v632, %v631
    %v634 = vmul.f32 %v633, %v632
    %v635 = vmul.f32 0.5, %v634
    %v636 = vsub.f32 1.5, %v635
    %v637 = vmul.f32 %v632, %v636
    %vm638 = vweird.f32 %v631
    %vm639 = vweird.f32 %v632
    %vm640 = vmor %vm638, %vm639
    %v641 = vsel %vm640, %v632, %v637
    %v642 = vmul.f32 %v620, %v641
    %644 = vrot.lane.b32.xlu0 %v642, 64
    %v645 = vpop.permute.xlu0 %644
    %v647 = vmul.f32 %v43, %v645
    %v648 = vadd.f32 %v647, %v44
    %650 = vrot.lane.b32.xlu0 %v648, 64
    %v651 = vpop.permute.xlu0 %650
    %653 = vst.msk [vmem:[#allocation7 + $0x3] sm:$0x1] %vm175, %v651
    %v654 = vld [vmem:[#allocation2 + $0x3] sm:$0x1]
    %v656 = vperm.slane %v654, 0
    %657 = vrot.lane.b32.xlu0 %v656, 32
    %v658 = vpop.permute.xlu0 %657
    %v660 = vsel %vm46, %v658, 0.0
    %661 = vadd.xlane.f32.xlu0 %v660
    %v662 = vpop.xlane.xlu0 %661
    %v663 = vmul.f32 %v662, %v56
    %v664 = vsub.f32 %v654, %v663
    %v665 = vmul.f32 %v664, %v664
    %v667 = vperm.slane %v665, 0
    %668 = vrot.lane.b32.xlu0 %v667, 32
    %v669 = vpop.permute.xlu0 %668
    %v671 = vsel %vm46, %v669, 0.0
    %672 = vadd.xlane.f32.xlu0 %v671
    %v673 = vpop.xlane.xlu0 %672
    %v674 = vmul.f32 %v673, %v56
    %v675 = vadd.f32 %v674, 1e-05
    %v676 = vrsqrt.pop %v675
    %v677 = vmul.f32 %v676, %v675
    %v678 = vmul.f32 %v677, %v676
    %v679 = vmul.f32 0.5, %v678
    %v680 = vsub.f32 1.5, %v679
    %v681 = vmul.f32 %v676, %v680
    %vm682 = vweird.f32 %v675
    %vm683 = vweird.f32 %v676
    %vm684 = vmor %vm682, %vm683
    %v685 = vsel %vm684, %v676, %v681
    %v686 = vmul.f32 %v664, %v685
    %688 = vrot.lane.b32.xlu0 %v686, 32
    %v689 = vpop.permute.xlu0 %688
    %v691 = vmul.f32 %v43, %v689
    %v692 = vadd.f32 %v691, %v44
    %694 = vrot.lane.b32.xlu0 %v692, 96
    %v695 = vpop.permute.xlu0 %694
    %697 = vst.msk [vmem:[#allocation7 + $0x3] sm:$0x1] %vm222, %v695
    // Predicated region
    $region22: #{tpu_custom_call.1} parent=1 // pred_check
      _
    $region23: #{tpu_custom_call.1} parent=1 // pred_check_branch
      %699 = sbr.rel (0) target = $region25
    $region24: #{tpu_custom_call.1} parent=1 // pred_region
      %701 = vsyncadd [#allocation4], 0
      %s703 = sshll.u32 [#allocation7], 4
      %s704 = int_to_ptr.vmem [resolvable:$true] %s703
      %s705 = sshll.u32 %s3, 4
      %s706 = int_to_ptr.hbm [resolvable:$true] %s705
      %708 = dma.vmem_to_hbm [thread:$0]  %s704, 64, %s706, [#allocation4]
    $region25: #{tpu_custom_call.1} parent=1 // pred_fallthru
      _
    // Predicated region
    $region26: #{tpu_custom_call.1} parent=1 // pred_check
      _
    $region27: #{tpu_custom_call.1} parent=1 // pred_check_branch
      %710 = sbr.rel (0) target = $region29
    $region28: #{tpu_custom_call.1} parent=1 // pred_region
      %712 = dma.done [#allocation4], 64
    $region29: #{tpu_custom_call.1} parent=1 // pred_fallthru
      _
    %713 = vsyncpa [#allocation3], 1
    %714 = vsyncpa [#allocation6], 1
    %715 = vsyncpa [#allocation4], 1

</llo_original>
